<compile_context>
chip_gen: v7x
topology: tpu7x:2x2x1
jax: 0.10.0
libtpu: 0.0.40
codegen_flags: <defaults>
</compile_context>

<pallas_src>
import jax
import jax.numpy as jnp
from jax.experimental import pallas as pl
from jax.experimental.pallas import tpu as pltpu

W = 125  # output width  (hardcoded by the module)
C = 8    # output chans  (hardcoded by the module)

# Tiling over N = H*W for large images.  2048 is a multiple of both 8 (input
# sublane constraint) and 128 (lane-dense, unmasked output stores) and keeps
# live VMEM ~2 MiB (the (2048, 8) input block pads to 2048x128 lanes = 1 MiB
# per pipeline buffer), comfortably inside the default scoped-VMEM limit on
# v5e / v6e / v7x (incl. v7x's smaller 64 MiB VMEM).
_TN_TILE = 2048
_SINGLE_BLOCK_MAX = 4096  # below this, use one grid step: no per-step overhead


def _restruct_kernel(x_ref, o_ref):
    # x_ref: (TN, C), o_ref: (C, TN).
    # The rearrange's only real work: a 2-D minor-dims transpose (XLU path,
    # no MXU / VPU pressure).  Everything else is free reshapes in the wrapper.
    o_ref[...] = x_ref[...].T


def restruct(img):
    """JAX/Pallas equivalent of the torch `restruct` module."""
    x = jnp.squeeze(img)          # mirrors torch.squeeze
    if x.ndim == 1:               # shape-safe guard for the H == 1 edge case
        x = x[None, :]
    assert x.ndim == 2 and x.shape[-1] == W * C, x.shape

    H = x.shape[0]
    N = H * W
    x2 = x.reshape(N, C)          # contiguous reshape: free

    # Single block (grid of 1) for small images; otherwise tile N in
    # 2048-row blocks (multiple of 8 and 128 -> BlockSpec constraints hold,
    # ragged last tile is masked by Pallas).
    tn = N if N <= _SINGLE_BLOCK_MAX else _TN_TILE
    grid = (pl.cdiv(N, tn),)

    out = pl.pallas_call(
        _restruct_kernel,
        out_shape=jax.ShapeDtypeStruct((C, N), x.dtype),
        grid=grid,
        in_specs=[pl.BlockSpec((tn, C), lambda i: (i, 0))],
        out_specs=pl.BlockSpec((C, tn), lambda i: (0, i)),
        compiler_params=pltpu.CompilerParams(
            # Lets v7x split tiles across its 2 TensorCores; measured neutral
            # on v5e/v6e (single TC).
            dimension_semantics=("parallel",)),
    )(x2)

    return out.reshape(C, H, W)   # contiguous reshape: free


if __name__ == "__main__":
    key = jax.random.PRNGKey(0)
    H = 16                                               # small spatial height
    img = jax.random.normal(key, (1, H, W * C), dtype=jnp.float32)  # squeezes to (16, 1000)

    out = jax.block_until_ready(restruct(img))

    # Pure-JAX reference of einops.rearrange(squeeze(img), 'h (w c) -> c h w', w=125, c=8)
    ref = jnp.transpose(jnp.squeeze(img).reshape(H, W, C), (2, 0, 1))

    assert out.shape == (C, H, W), out.shape
    assert out.dtype == img.dtype
    # Pure data movement -> must be bit-exact, not merely allclose.
    assert bool(jnp.array_equal(out, ref)), "mismatch vs reference"
    print("KERNEL_OK")
</pallas_src>

<mosaic_0001>
module attributes {stable_mosaic.version = 11 : i64} {
  func.func @_restruct_kernel(%arg0: i32, %arg1: memref<2000x8xf32, #tpu.memory_space<vmem>>, %arg2: memref<8x2000xf32, #tpu.memory_space<vmem>>) attributes {dimension_semantics = [#tpu.dimension_semantics<parallel>], iteration_bounds = array<i64: 1>, scalar_prefetch = 0 : i64, scratch_operands = 0 : i64, tpu.core_type = #tpu.core_type<tc>, window_params = [{transform_indices = @transform_0, window_bounds = array<i64: 2000, 8>}, {transform_indices = @transform_1, window_bounds = array<i64: 8, 2000>}]} {
    %c0 = arith.constant 0 : index
    %c0_0 = arith.constant 0 : index
    %0 = vector.load %arg1[%c0, %c0_0] : memref<2000x8xf32, #tpu.memory_space<vmem>>, vector<2000x8xf32>
    %1 = tpu.transpose %0, [1, 0] : vector<2000x8xf32> -> vector<8x2000xf32>
    %c0_1 = arith.constant 0 : index
    %c0_2 = arith.constant 0 : index
    %2 = vector.load %arg2[%c0_1, %c0_2] : memref<8x2000xf32, #tpu.memory_space<vmem>>, vector<8x2000xf32>
    tpu.vector_store %arg2[%c0_1, %c0_2], %1 {strides = array<i32>} : memref<8x2000xf32, #tpu.memory_space<vmem>>, vector<8x2000xf32>,
    return
  }
  func.func @transform_0(%arg0: i32) -> (i32, i32) {
    %c0_i32 = arith.constant 0 : i32
    %c0_i32_0 = arith.constant 0 : i32
    return %arg0, %c0_i32 : i32, i32
  }
  func.func @transform_1(%arg0: i32) -> (i32, i32) {
    %c0_i32 = arith.constant 0 : i32
    %c0_i32_0 = arith.constant 0 : i32
    return %c0_i32, %arg0 : i32, i32
  }
}

</mosaic_0001>

<llo_original>
// kernel: tpu_custom_call.1
$region0: #{tpu_custom_call.1}
  #allocation0 [shape = 'u32[]', space=smem, size = 0x4, offset = 0x4, fixed_abs, tag = 'smem constant byte address 0x4 - core index']
  #allocation1 [shape = 'u32[144,128]{1,0:T(1,128)}', space=vmem, size = 0x12000, scoped, tag = 'internal scratch']
  %s0 = inlined_call_operand.vmem [shape: f32[2000,8], index: 0, kind: input, shape index: {}]
  %s1 = inlined_call_operand.hbm [shape: f32[8,2000], index: 1, kind: output, shape index: {}]
  %s2 = sld [smem:[#allocation0]]
  $region14: #{tpu_custom_call.1} parent=0
    _
  %s4 = ssub.s32 1, %s2
  %s5 = scalar_select 0, %s4, %s2
  $region1: #{tpu_custom_call.1} parent=0
    #allocation2 [shape = 'u8[65536]{0}', space=vmem, size = 0x10000, scoped, tag = 'output window, operand 0, single buffered']
    #allocation3 [shape = 's32[1]{0}', space=sflag, size = 0x4, scoped, tag = 'scoped memory for tpu_custom_call.1']
    %6 = vsyncpa [#allocation3], 0
    // Predicated region
    $region2: #{tpu_custom_call.1} parent=1 // pred_check
      _
    $region3: #{tpu_custom_call.1} parent=1 // pred_check_branch
      %8 = sbr.rel (0) target = $region5
    $region4: #{tpu_custom_call.1} parent=1 // pred_region
      _
    $region5: #{tpu_custom_call.1} parent=1 // pred_fallthru
      _
    %v9 = vld [vmem:[%s0] sm:$0xff]
    %v10 = vld [vmem:[%s0 + $0x8] sm:$0xff]
    %v11 = vld [vmem:[%s0 + $0x10] sm:$0xff]
    %v12 = vld [vmem:[%s0 + $0x18] sm:$0xff]
    %v13 = vld [vmem:[%s0 + $0x20] sm:$0xff]
    %v14 = vld [vmem:[%s0 + $0x28] sm:$0xff]
    %v15 = vld [vmem:[%s0 + $0x30] sm:$0xff]
    %v16 = vld [vmem:[%s0 + $0x38] sm:$0xff]
    %v17 = vld [vmem:[%s0 + $0x40] sm:$0xff]
    %v18 = vld [vmem:[%s0 + $0x48] sm:$0xff]
    %v19 = vld [vmem:[%s0 + $0x50] sm:$0xff]
    %v20 = vld [vmem:[%s0 + $0x58] sm:$0xff]
    %v21 = vld [vmem:[%s0 + $0x60] sm:$0xff]
    %v22 = vld [vmem:[%s0 + $0x68] sm:$0xff]
    %v23 = vld [vmem:[%s0 + $0x70] sm:$0xff]
    %v24 = vld [vmem:[%s0 + $0x78] sm:$0xff]
    %v25 = vld [vmem:[%s0 + $0x80] sm:$0xff]
    %v26 = vld [vmem:[%s0 + $0x88] sm:$0xff]
    %v27 = vld [vmem:[%s0 + $0x90] sm:$0xff]
    %v28 = vld [vmem:[%s0 + $0x98] sm:$0xff]
    %v29 = vld [vmem:[%s0 + $0xa0] sm:$0xff]
    %v30 = vld [vmem:[%s0 + $0xa8] sm:$0xff]
    %v31 = vld [vmem:[%s0 + $0xb0] sm:$0xff]
    %v32 = vld [vmem:[%s0 + $0xb8] sm:$0xff]
    %v33 = vld [vmem:[%s0 + $0xc0] sm:$0xff]
    %v34 = vld [vmem:[%s0 + $0xc8] sm:$0xff]
    %v35 = vld [vmem:[%s0 + $0xd0] sm:$0xff]
    %v36 = vld [vmem:[%s0 + $0xd8] sm:$0xff]
    %v37 = vld [vmem:[%s0 + $0xe0] sm:$0xff]
    %v38 = vld [vmem:[%s0 + $0xe8] sm:$0xff]
    %v39 = vld [vmem:[%s0 + $0xf0] sm:$0xff]
    %v40 = vld [vmem:[%s0 + $0xf8] sm:$0xff]
    %v41 = vld [vmem:[%s0 + $0x100] sm:$0xff]
    %v42 = vld [vmem:[%s0 + $0x108] sm:$0xff]
    %v43 = vld [vmem:[%s0 + $0x110] sm:$0xff]
    %v44 = vld [vmem:[%s0 + $0x118] sm:$0xff]
    %v45 = vld [vmem:[%s0 + $0x120] sm:$0xff]
    %v46 = vld [vmem:[%s0 + $0x128] sm:$0xff]
    %v47 = vld [vmem:[%s0 + $0x130] sm:$0xff]
    %v48 = vld [vmem:[%s0 + $0x138] sm:$0xff]
    %v49 = vld [vmem:[%s0 + $0x140] sm:$0xff]
    %v50 = vld [vmem:[%s0 + $0x148] sm:$0xff]
    %v51 = vld [vmem:[%s0 + $0x150] sm:$0xff]
    %v52 = vld [vmem:[%s0 + $0x158] sm:$0xff]
    %v53 = vld [vmem:[%s0 + $0x160] sm:$0xff]
    %v54 = vld [vmem:[%s0 + $0x168] sm:$0xff]
    %v55 = vld [vmem:[%s0 + $0x170] sm:$0xff]
    %v56 = vld [vmem:[%s0 + $0x178] sm:$0xff]
    %v57 = vld [vmem:[%s0 + $0x180] sm:$0xff]
    %v58 = vld [vmem:[%s0 + $0x188] sm:$0xff]
    %v59 = vld [vmem:[%s0 + $0x190] sm:$0xff]
    %v60 = vld [vmem:[%s0 + $0x198] sm:$0xff]
    %v61 = vld [vmem:[%s0 + $0x1a0] sm:$0xff]
    %v62 = vld [vmem:[%s0 + $0x1a8] sm:$0xff]
    %v63 = vld [vmem:[%s0 + $0x1b0] sm:$0xff]
    %v64 = vld [vmem:[%s0 + $0x1b8] sm:$0xff]
    %v65 = vld [vmem:[%s0 + $0x1c0] sm:$0xff]
    %v66 = vld [vmem:[%s0 + $0x1c8] sm:$0xff]
    %v67 = vld [vmem:[%s0 + $0x1d0] sm:$0xff]
    %v68 = vld [vmem:[%s0 + $0x1d8] sm:$0xff]
    %v69 = vld [vmem:[%s0 + $0x1e0] sm:$0xff]
    %v70 = vld [vmem:[%s0 + $0x1e8] sm:$0xff]
    %v71 = vld [vmem:[%s0 + $0x1f0] sm:$0xff]
    %v72 = vld [vmem:[%s0 + $0x1f8] sm:$0xff]
    %v73 = vld [vmem:[%s0 + $0x200] sm:$0xff]
    %v74 = vld [vmem:[%s0 + $0x208] sm:$0xff]
    %v75 = vld [vmem:[%s0 + $0x210] sm:$0xff]
    %v76 = vld [vmem:[%s0 + $0x218] sm:$0xff]
    %v77 = vld [vmem:[%s0 + $0x220] sm:$0xff]
    %v78 = vld [vmem:[%s0 + $0x228] sm:$0xff]
    %v79 = vld [vmem:[%s0 + $0x230] sm:$0xff]
    %v80 = vld [vmem:[%s0 + $0x238] sm:$0xff]
    %v81 = vld [vmem:[%s0 + $0x240] sm:$0xff]
    %v82 = vld [vmem:[%s0 + $0x248] sm:$0xff]
    %v83 = vld [vmem:[%s0 + $0x250] sm:$0xff]
    %v84 = vld [vmem:[%s0 + $0x258] sm:$0xff]
    %v85 = vld [vmem:[%s0 + $0x260] sm:$0xff]
    %v86 = vld [vmem:[%s0 + $0x268] sm:$0xff]
    %v87 = vld [vmem:[%s0 + $0x270] sm:$0xff]
    %v88 = vld [vmem:[%s0 + $0x278] sm:$0xff]
    %v89 = vld [vmem:[%s0 + $0x280] sm:$0xff]
    %v90 = vld [vmem:[%s0 + $0x288] sm:$0xff]
    %v91 = vld [vmem:[%s0 + $0x290] sm:$0xff]
    %v92 = vld [vmem:[%s0 + $0x298] sm:$0xff]
    %v93 = vld [vmem:[%s0 + $0x2a0] sm:$0xff]
    %v94 = vld [vmem:[%s0 + $0x2a8] sm:$0xff]
    %v95 = vld [vmem:[%s0 + $0x2b0] sm:$0xff]
    %v96 = vld [vmem:[%s0 + $0x2b8] sm:$0xff]
    %v97 = vld [vmem:[%s0 + $0x2c0] sm:$0xff]
    %v98 = vld [vmem:[%s0 + $0x2c8] sm:$0xff]
    %v99 = vld [vmem:[%s0 + $0x2d0] sm:$0xff]
    %v100 = vld [vmem:[%s0 + $0x2d8] sm:$0xff]
    %v101 = vld [vmem:[%s0 + $0x2e0] sm:$0xff]
    %v102 = vld [vmem:[%s0 + $0x2e8] sm:$0xff]
    %v103 = vld [vmem:[%s0 + $0x2f0] sm:$0xff]
    %v104 = vld [vmem:[%s0 + $0x2f8] sm:$0xff]
    %v105 = vld [vmem:[%s0 + $0x300] sm:$0xff]
    %v106 = vld [vmem:[%s0 + $0x308] sm:$0xff]
    %v107 = vld [vmem:[%s0 + $0x310] sm:$0xff]
    %v108 = vld [vmem:[%s0 + $0x318] sm:$0xff]
    %v109 = vld [vmem:[%s0 + $0x320] sm:$0xff]
    %v110 = vld [vmem:[%s0 + $0x328] sm:$0xff]
    %v111 = vld [vmem:[%s0 + $0x330] sm:$0xff]
    %v112 = vld [vmem:[%s0 + $0x338] sm:$0xff]
    %v113 = vld [vmem:[%s0 + $0x340] sm:$0xff]
    %v114 = vld [vmem:[%s0 + $0x348] sm:$0xff]
    %v115 = vld [vmem:[%s0 + $0x350] sm:$0xff]
    %v116 = vld [vmem:[%s0 + $0x358] sm:$0xff]
    %v117 = vld [vmem:[%s0 + $0x360] sm:$0xff]
    %v118 = vld [vmem:[%s0 + $0x368] sm:$0xff]
    %v119 = vld [vmem:[%s0 + $0x370] sm:$0xff]
    %v120 = vld [vmem:[%s0 + $0x378] sm:$0xff]
    %v121 = vld [vmem:[%s0 + $0x380] sm:$0xff]
    %v122 = vld [vmem:[%s0 + $0x388] sm:$0xff]
    %v123 = vld [vmem:[%s0 + $0x390] sm:$0xff]
    %v124 = vld [vmem:[%s0 + $0x398] sm:$0xff]
    %v125 = vld [vmem:[%s0 + $0x3a0] sm:$0xff]
    %v126 = vld [vmem:[%s0 + $0x3a8] sm:$0xff]
    %v127 = vld [vmem:[%s0 + $0x3b0] sm:$0xff]
    %v128 = vld [vmem:[%s0 + $0x3b8] sm:$0xff]
    %v129 = vld [vmem:[%s0 + $0x3c0] sm:$0xff]
    %v130 = vld [vmem:[%s0 + $0x3c8] sm:$0xff]
    %v131 = vld [vmem:[%s0 + $0x3d0] sm:$0xff]
    %v132 = vld [vmem:[%s0 + $0x3d8] sm:$0xff]
    %v133 = vld [vmem:[%s0 + $0x3e0] sm:$0xff]
    %v134 = vld [vmem:[%s0 + $0x3e8] sm:$0xff]
    %v135 = vld [vmem:[%s0 + $0x3f0] sm:$0xff]
    %v136 = vld [vmem:[%s0 + $0x3f8] sm:$0xff]
    %v137 = vld [vmem:[%s0 + $0x400] sm:$0xff]
    %v138 = vld [vmem:[%s0 + $0x408] sm:$0xff]
    %v139 = vld [vmem:[%s0 + $0x410] sm:$0xff]
    %v140 = vld [vmem:[%s0 + $0x418] sm:$0xff]
    %v141 = vld [vmem:[%s0 + $0x420] sm:$0xff]
    %v142 = vld [vmem:[%s0 + $0x428] sm:$0xff]
    %v143 = vld [vmem:[%s0 + $0x430] sm:$0xff]
    %v144 = vld [vmem:[%s0 + $0x438] sm:$0xff]
    %v145 = vld [vmem:[%s0 + $0x440] sm:$0xff]
    %v146 = vld [vmem:[%s0 + $0x448] sm:$0xff]
    %v147 = vld [vmem:[%s0 + $0x450] sm:$0xff]
    %v148 = vld [vmem:[%s0 + $0x458] sm:$0xff]
    %v149 = vld [vmem:[%s0 + $0x460] sm:$0xff]
    %v150 = vld [vmem:[%s0 + $0x468] sm:$0xff]
    %v151 = vld [vmem:[%s0 + $0x470] sm:$0xff]
    %v152 = vld [vmem:[%s0 + $0x478] sm:$0xff]
    %v153 = vld [vmem:[%s0 + $0x480] sm:$0xff]
    %v154 = vld [vmem:[%s0 + $0x488] sm:$0xff]
    %v155 = vld [vmem:[%s0 + $0x490] sm:$0xff]
    %v156 = vld [vmem:[%s0 + $0x498] sm:$0xff]
    %v157 = vld [vmem:[%s0 + $0x4a0] sm:$0xff]
    %v158 = vld [vmem:[%s0 + $0x4a8] sm:$0xff]
    %v159 = vld [vmem:[%s0 + $0x4b0] sm:$0xff]
    %v160 = vld [vmem:[%s0 + $0x4b8] sm:$0xff]
    %v161 = vld [vmem:[%s0 + $0x4c0] sm:$0xff]
    %v162 = vld [vmem:[%s0 + $0x4c8] sm:$0xff]
    %v163 = vld [vmem:[%s0 + $0x4d0] sm:$0xff]
    %v164 = vld [vmem:[%s0 + $0x4d8] sm:$0xff]
    %v165 = vld [vmem:[%s0 + $0x4e0] sm:$0xff]
    %v166 = vld [vmem:[%s0 + $0x4e8] sm:$0xff]
    %v167 = vld [vmem:[%s0 + $0x4f0] sm:$0xff]
    %v168 = vld [vmem:[%s0 + $0x4f8] sm:$0xff]
    %v169 = vld [vmem:[%s0 + $0x500] sm:$0xff]
    %v170 = vld [vmem:[%s0 + $0x508] sm:$0xff]
    %v171 = vld [vmem:[%s0 + $0x510] sm:$0xff]
    %v172 = vld [vmem:[%s0 + $0x518] sm:$0xff]
    %v173 = vld [vmem:[%s0 + $0x520] sm:$0xff]
    %v174 = vld [vmem:[%s0 + $0x528] sm:$0xff]
    %v175 = vld [vmem:[%s0 + $0x530] sm:$0xff]
    %v176 = vld [vmem:[%s0 + $0x538] sm:$0xff]
    %v177 = vld [vmem:[%s0 + $0x540] sm:$0xff]
    %v178 = vld [vmem:[%s0 + $0x548] sm:$0xff]
    %v179 = vld [vmem:[%s0 + $0x550] sm:$0xff]
    %v180 = vld [vmem:[%s0 + $0x558] sm:$0xff]
    %v181 = vld [vmem:[%s0 + $0x560] sm:$0xff]
    %v182 = vld [vmem:[%s0 + $0x568] sm:$0xff]
    %v183 = vld [vmem:[%s0 + $0x570] sm:$0xff]
    %v184 = vld [vmem:[%s0 + $0x578] sm:$0xff]
    %v185 = vld [vmem:[%s0 + $0x580] sm:$0xff]
    %v186 = vld [vmem:[%s0 + $0x588] sm:$0xff]
    %v187 = vld [vmem:[%s0 + $0x590] sm:$0xff]
    %v188 = vld [vmem:[%s0 + $0x598] sm:$0xff]
    %v189 = vld [vmem:[%s0 + $0x5a0] sm:$0xff]
    %v190 = vld [vmem:[%s0 + $0x5a8] sm:$0xff]
    %v191 = vld [vmem:[%s0 + $0x5b0] sm:$0xff]
    %v192 = vld [vmem:[%s0 + $0x5b8] sm:$0xff]
    %v193 = vld [vmem:[%s0 + $0x5c0] sm:$0xff]
    %v194 = vld [vmem:[%s0 + $0x5c8] sm:$0xff]
    %v195 = vld [vmem:[%s0 + $0x5d0] sm:$0xff]
    %v196 = vld [vmem:[%s0 + $0x5d8] sm:$0xff]
    %v197 = vld [vmem:[%s0 + $0x5e0] sm:$0xff]
    %v198 = vld [vmem:[%s0 + $0x5e8] sm:$0xff]
    %v199 = vld [vmem:[%s0 + $0x5f0] sm:$0xff]
    %v200 = vld [vmem:[%s0 + $0x5f8] sm:$0xff]
    %v201 = vld [vmem:[%s0 + $0x600] sm:$0xff]
    %v202 = vld [vmem:[%s0 + $0x608] sm:$0xff]
    %v203 = vld [vmem:[%s0 + $0x610] sm:$0xff]
    %v204 = vld [vmem:[%s0 + $0x618] sm:$0xff]
    %v205 = vld [vmem:[%s0 + $0x620] sm:$0xff]
    %v206 = vld [vmem:[%s0 + $0x628] sm:$0xff]
    %v207 = vld [vmem:[%s0 + $0x630] sm:$0xff]
    %v208 = vld [vmem:[%s0 + $0x638] sm:$0xff]
    %v209 = vld [vmem:[%s0 + $0x640] sm:$0xff]
    %v210 = vld [vmem:[%s0 + $0x648] sm:$0xff]
    %v211 = vld [vmem:[%s0 + $0x650] sm:$0xff]
    %v212 = vld [vmem:[%s0 + $0x658] sm:$0xff]
    %v213 = vld [vmem:[%s0 + $0x660] sm:$0xff]
    %v214 = vld [vmem:[%s0 + $0x668] sm:$0xff]
    %v215 = vld [vmem:[%s0 + $0x670] sm:$0xff]
    %v216 = vld [vmem:[%s0 + $0x678] sm:$0xff]
    %v217 = vld [vmem:[%s0 + $0x680] sm:$0xff]
    %v218 = vld [vmem:[%s0 + $0x688] sm:$0xff]
    %v219 = vld [vmem:[%s0 + $0x690] sm:$0xff]
    %v220 = vld [vmem:[%s0 + $0x698] sm:$0xff]
    %v221 = vld [vmem:[%s0 + $0x6a0] sm:$0xff]
    %v222 = vld [vmem:[%s0 + $0x6a8] sm:$0xff]
    %v223 = vld [vmem:[%s0 + $0x6b0] sm:$0xff]
    %v224 = vld [vmem:[%s0 + $0x6b8] sm:$0xff]
    %v225 = vld [vmem:[%s0 + $0x6c0] sm:$0xff]
    %v226 = vld [vmem:[%s0 + $0x6c8] sm:$0xff]
    %v227 = vld [vmem:[%s0 + $0x6d0] sm:$0xff]
    %v228 = vld [vmem:[%s0 + $0x6d8] sm:$0xff]
    %v229 = vld [vmem:[%s0 + $0x6e0] sm:$0xff]
    %v230 = vld [vmem:[%s0 + $0x6e8] sm:$0xff]
    %v231 = vld [vmem:[%s0 + $0x6f0] sm:$0xff]
    %v232 = vld [vmem:[%s0 + $0x6f8] sm:$0xff]
    %v233 = vld [vmem:[%s0 + $0x700] sm:$0xff]
    %v234 = vld [vmem:[%s0 + $0x708] sm:$0xff]
    %v235 = vld [vmem:[%s0 + $0x710] sm:$0xff]
    %v236 = vld [vmem:[%s0 + $0x718] sm:$0xff]
    %v237 = vld [vmem:[%s0 + $0x720] sm:$0xff]
    %v238 = vld [vmem:[%s0 + $0x728] sm:$0xff]
    %v239 = vld [vmem:[%s0 + $0x730] sm:$0xff]
    %v240 = vld [vmem:[%s0 + $0x738] sm:$0xff]
    %v241 = vld [vmem:[%s0 + $0x740] sm:$0xff]
    %v242 = vld [vmem:[%s0 + $0x748] sm:$0xff]
    %v243 = vld [vmem:[%s0 + $0x750] sm:$0xff]
    %v244 = vld [vmem:[%s0 + $0x758] sm:$0xff]
    %v245 = vld [vmem:[%s0 + $0x760] sm:$0xff]
    %v246 = vld [vmem:[%s0 + $0x768] sm:$0xff]
    %v247 = vld [vmem:[%s0 + $0x770] sm:$0xff]
    %v248 = vld [vmem:[%s0 + $0x778] sm:$0xff]
    %v249 = vld [vmem:[%s0 + $0x780] sm:$0xff]
    %v250 = vld [vmem:[%s0 + $0x788] sm:$0xff]
    %v251 = vld [vmem:[%s0 + $0x790] sm:$0xff]
    %v252 = vld [vmem:[%s0 + $0x798] sm:$0xff]
    %v253 = vld [vmem:[%s0 + $0x7a0] sm:$0xff]
    %v254 = vld [vmem:[%s0 + $0x7a8] sm:$0xff]
    %v255 = vld [vmem:[%s0 + $0x7b0] sm:$0xff]
    %v256 = vld [vmem:[%s0 + $0x7b8] sm:$0xff]
    %v257 = vld [vmem:[%s0 + $0x7c0] sm:$0xff]
    %v258 = vld [vmem:[%s0 + $0x7c8] sm:$0xff]
    %259 = vxpose.xlu0.b32.start [1/16] %v9, 128
    %260 = vxpose.xlu0.b32.cont [2/16] %v10, 128
    %261 = vxpose.xlu0.b32.cont [3/16] %v11, 128
    %262 = vxpose.xlu0.b32.cont [4/16] %v12, 128
    %263 = vxpose.xlu0.b32.cont [5/16] %v13, 128
    %264 = vxpose.xlu0.b32.cont [6/16] %v14, 128
    %265 = vxpose.xlu0.b32.cont [7/16] %v15, 128
    %266 = vxpose.xlu0.b32.cont [8/16] %v16, 128
    %267 = vxpose.xlu0.b32.cont [9/16] %v17, 128
    %268 = vxpose.xlu0.b32.cont [10/16] %v18, 128
    %269 = vxpose.xlu0.b32.cont [11/16] %v19, 128
    %270 = vxpose.xlu0.b32.cont [12/16] %v20, 128
    %271 = vxpose.xlu0.b32.cont [13/16] %v21, 128
    %272 = vxpose.xlu0.b32.cont [14/16] %v22, 128
    %273 = vxpose.xlu0.b32.cont [15/16] %v23, 128
    %274 = vxpose.xlu0.b32.end [16/16] %v24, 128
    %v275 = vpop.trf.xlu0
    %v276 = vpop.trf.xlu0
    %v277 = vpop.trf.xlu0
    %v278 = vpop.trf.xlu0
    %v279 = vpop.trf.xlu0
    %v280 = vpop.trf.xlu0
    %v281 = vpop.trf.xlu0
    %v282 = vpop.trf.xlu0
    %v283 = vpop.trf.xlu0
    %v284 = vpop.trf.xlu0
    %v285 = vpop.trf.xlu0
    %v286 = vpop.trf.xlu0
    %v287 = vpop.trf.xlu0
    %v288 = vpop.trf.xlu0
    %v289 = vpop.trf.xlu0
    %v290 = vpop.trf.xlu0
    %291 = vxpose.xlu0.b32.start [1/16] %v25, 128
    %292 = vxpose.xlu0.b32.cont [2/16] %v26, 128
    %293 = vxpose.xlu0.b32.cont [3/16] %v27, 128
    %294 = vxpose.xlu0.b32.cont [4/16] %v28, 128
    %295 = vxpose.xlu0.b32.cont [5/16] %v29, 128
    %296 = vxpose.xlu0.b32.cont [6/16] %v30, 128
    %297 = vxpose.xlu0.b32.cont [7/16] %v31, 128
    %298 = vxpose.xlu0.b32.cont [8/16] %v32, 128
    %299 = vxpose.xlu0.b32.cont [9/16] %v33, 128
    %300 = vxpose.xlu0.b32.cont [10/16] %v34, 128
    %301 = vxpose.xlu0.b32.cont [11/16] %v35, 128
    %302 = vxpose.xlu0.b32.cont [12/16] %v36, 128
    %303 = vxpose.xlu0.b32.cont [13/16] %v37, 128
    %304 = vxpose.xlu0.b32.cont [14/16] %v38, 128
    %305 = vxpose.xlu0.b32.cont [15/16] %v39, 128
    %306 = vxpose.xlu0.b32.end [16/16] %v40, 128
    %v307 = vpop.trf.xlu0
    %v308 = vpop.trf.xlu0
    %v309 = vpop.trf.xlu0
    %v310 = vpop.trf.xlu0
    %v311 = vpop.trf.xlu0
    %v312 = vpop.trf.xlu0
    %v313 = vpop.trf.xlu0
    %v314 = vpop.trf.xlu0
    %v315 = vpop.trf.xlu0
    %v316 = vpop.trf.xlu0
    %v317 = vpop.trf.xlu0
    %v318 = vpop.trf.xlu0
    %v319 = vpop.trf.xlu0
    %v320 = vpop.trf.xlu0
    %v321 = vpop.trf.xlu0
    %v322 = vpop.trf.xlu0
    %323 = vxpose.xlu0.b32.start [1/16] %v41, 128
    %324 = vxpose.xlu0.b32.cont [2/16] %v42, 128
    %325 = vxpose.xlu0.b32.cont [3/16] %v43, 128
    %326 = vxpose.xlu0.b32.cont [4/16] %v44, 128
    %327 = vxpose.xlu0.b32.cont [5/16] %v45, 128
    %328 = vxpose.xlu0.b32.cont [6/16] %v46, 128
    %329 = vxpose.xlu0.b32.cont [7/16] %v47, 128
    %330 = vxpose.xlu0.b32.cont [8/16] %v48, 128
    %331 = vxpose.xlu0.b32.cont [9/16] %v49, 128
    %332 = vxpose.xlu0.b32.cont [10/16] %v50, 128
    %333 = vxpose.xlu0.b32.cont [11/16] %v51, 128
    %334 = vxpose.xlu0.b32.cont [12/16] %v52, 128
    %335 = vxpose.xlu0.b32.cont [13/16] %v53, 128
    %336 = vxpose.xlu0.b32.cont [14/16] %v54, 128
    %337 = vxpose.xlu0.b32.cont [15/16] %v55, 128
    %338 = vxpose.xlu0.b32.end [16/16] %v56, 128
    %v339 = vpop.trf.xlu0
    %v340 = vpop.trf.xlu0
    %v341 = vpop.trf.xlu0
    %v342 = vpop.trf.xlu0
    %v343 = vpop.trf.xlu0
    %v344 = vpop.trf.xlu0
    %v345 = vpop.trf.xlu0
    %v346 = vpop.trf.xlu0
    %v347 = vpop.trf.xlu0
    %v348 = vpop.trf.xlu0
    %v349 = vpop.trf.xlu0
    %v350 = vpop.trf.xlu0
    %v351 = vpop.trf.xlu0
    %v352 = vpop.trf.xlu0
    %v353 = vpop.trf.xlu0
    %v354 = vpop.trf.xlu0
    %355 = vxpose.xlu0.b32.start [1/16] %v57, 128
    %356 = vxpose.xlu0.b32.cont [2/16] %v58, 128
    %357 = vxpose.xlu0.b32.cont [3/16] %v59, 128
    %358 = vxpose.xlu0.b32.cont [4/16] %v60, 128
    %359 = vxpose.xlu0.b32.cont [5/16] %v61, 128
    %360 = vxpose.xlu0.b32.cont [6/16] %v62, 128
    %361 = vxpose.xlu0.b32.cont [7/16] %v63, 128
    %362 = vxpose.xlu0.b32.cont [8/16] %v64, 128
    %363 = vxpose.xlu0.b32.cont [9/16] %v65, 128
    %364 = vxpose.xlu0.b32.cont [10/16] %v66, 128
    %365 = vxpose.xlu0.b32.cont [11/16] %v67, 128
    %366 = vxpose.xlu0.b32.cont [12/16] %v68, 128
    %367 = vxpose.xlu0.b32.cont [13/16] %v69, 128
    %368 = vxpose.xlu0.b32.cont [14/16] %v70, 128
    %369 = vxpose.xlu0.b32.cont [15/16] %v71, 128
    %370 = vxpose.xlu0.b32.end [16/16] %v72, 128
    %v371 = vpop.trf.xlu0
    %v372 = vpop.trf.xlu0
    %v373 = vpop.trf.xlu0
    %v374 = vpop.trf.xlu0
    %v375 = vpop.trf.xlu0
    %v376 = vpop.trf.xlu0
    %v377 = vpop.trf.xlu0
    %v378 = vpop.trf.xlu0
    %v379 = vpop.trf.xlu0
    %v380 = vpop.trf.xlu0
    %v381 = vpop.trf.xlu0
    %v382 = vpop.trf.xlu0
    %v383 = vpop.trf.xlu0
    %v384 = vpop.trf.xlu0
    %v385 = vpop.trf.xlu0
    %v386 = vpop.trf.xlu0
    %387 = vxpose.xlu0.b32.start [1/16] %v73, 128
    %388 = vxpose.xlu0.b32.cont [2/16] %v74, 128
    %389 = vxpose.xlu0.b32.cont [3/16] %v75, 128
    %390 = vxpose.xlu0.b32.cont [4/16] %v76, 128
    %391 = vxpose.xlu0.b32.cont [5/16] %v77, 128
    %392 = vxpose.xlu0.b32.cont [6/16] %v78, 128
    %393 = vxpose.xlu0.b32.cont [7/16] %v79, 128
    %394 = vxpose.xlu0.b32.cont [8/16] %v80, 128
    %395 = vxpose.xlu0.b32.cont [9/16] %v81, 128
    %396 = vxpose.xlu0.b32.cont [10/16] %v82, 128
    %397 = vxpose.xlu0.b32.cont [11/16] %v83, 128
    %398 = vxpose.xlu0.b32.cont [12/16] %v84, 128
    %399 = vxpose.xlu0.b32.cont [13/16] %v85, 128
    %400 = vxpose.xlu0.b32.cont [14/16] %v86, 128
    %401 = vxpose.xlu0.b32.cont [15/16] %v87, 128
    %402 = vxpose.xlu0.b32.end [16/16] %v88, 128
    %v403 = vpop.trf.xlu0
    %v404 = vpop.trf.xlu0
    %v405 = vpop.trf.xlu0
    %v406 = vpop.trf.xlu0
    %v407 = vpop.trf.xlu0
    %v408 = vpop.trf.xlu0
    %v409 = vpop.trf.xlu0
    %v410 = vpop.trf.xlu0
    %v411 = vpop.trf.xlu0
    %v412 = vpop.trf.xlu0
    %v413 = vpop.trf.xlu0
    %v414 = vpop.trf.xlu0
    %v415 = vpop.trf.xlu0
    %v416 = vpop.trf.xlu0
    %v417 = vpop.trf.xlu0
    %v418 = vpop.trf.xlu0
    %419 = vxpose.xlu0.b32.start [1/16] %v89, 128
    %420 = vxpose.xlu0.b32.cont [2/16] %v90, 128
    %421 = vxpose.xlu0.b32.cont [3/16] %v91, 128
    %422 = vxpose.xlu0.b32.cont [4/16] %v92, 128
    %423 = vxpose.xlu0.b32.cont [5/16] %v93, 128
    %424 = vxpose.xlu0.b32.cont [6/16] %v94, 128
    %425 = vxpose.xlu0.b32.cont [7/16] %v95, 128
    %426 = vxpose.xlu0.b32.cont [8/16] %v96, 128
    %427 = vxpose.xlu0.b32.cont [9/16] %v97, 128
    %428 = vxpose.xlu0.b32.cont [10/16] %v98, 128
    %429 = vxpose.xlu0.b32.cont [11/16] %v99, 128
    %430 = vxpose.xlu0.b32.cont [12/16] %v100, 128
    %431 = vxpose.xlu0.b32.cont [13/16] %v101, 128
    %432 = vxpose.xlu0.b32.cont [14/16] %v102, 128
    %433 = vxpose.xlu0.b32.cont [15/16] %v103, 128
    %434 = vxpose.xlu0.b32.end [16/16] %v104, 128
    %v435 = vpop.trf.xlu0
    %v436 = vpop.trf.xlu0
    %v437 = vpop.trf.xlu0
    %v438 = vpop.trf.xlu0
    %v439 = vpop.trf.xlu0
    %v440 = vpop.trf.xlu0
    %v441 = vpop.trf.xlu0
    %v442 = vpop.trf.xlu0
    %v443 = vpop.trf.xlu0
    %v444 = vpop.trf.xlu0
    %v445 = vpop.trf.xlu0
    %v446 = vpop.trf.xlu0
    %v447 = vpop.trf.xlu0
    %v448 = vpop.trf.xlu0
    %v449 = vpop.trf.xlu0
    %v450 = vpop.trf.xlu0
    %451 = vxpose.xlu0.b32.start [1/16] %v105, 128
    %452 = vxpose.xlu0.b32.cont [2/16] %v106, 128
    %453 = vxpose.xlu0.b32.cont [3/16] %v107, 128
    %454 = vxpose.xlu0.b32.cont [4/16] %v108, 128
    %455 = vxpose.xlu0.b32.cont [5/16] %v109, 128
    %456 = vxpose.xlu0.b32.cont [6/16] %v110, 128
    %457 = vxpose.xlu0.b32.cont [7/16] %v111, 128
    %458 = vxpose.xlu0.b32.cont [8/16] %v112, 128
    %459 = vxpose.xlu0.b32.cont [9/16] %v113, 128
    %460 = vxpose.xlu0.b32.cont [10/16] %v114, 128
    %461 = vxpose.xlu0.b32.cont [11/16] %v115, 128
    %462 = vxpose.xlu0.b32.cont [12/16] %v116, 128
    %463 = vxpose.xlu0.b32.cont [13/16] %v117, 128
    %464 = vxpose.xlu0.b32.cont [14/16] %v118, 128
    %465 = vxpose.xlu0.b32.cont [15/16] %v119, 128
    %466 = vxpose.xlu0.b32.end [16/16] %v120, 128
    %v467 = vpop.trf.xlu0
    %v468 = vpop.trf.xlu0
    %v469 = vpop.trf.xlu0
    %v470 = vpop.trf.xlu0
    %v471 = vpop.trf.xlu0
    %v472 = vpop.trf.xlu0
    %v473 = vpop.trf.xlu0
    %v474 = vpop.trf.xlu0
    %v475 = vpop.trf.xlu0
    %v476 = vpop.trf.xlu0
    %v477 = vpop.trf.xlu0
    %v478 = vpop.trf.xlu0
    %v479 = vpop.trf.xlu0
    %v480 = vpop.trf.xlu0
    %v481 = vpop.trf.xlu0
    %v482 = vpop.trf.xlu0
    %483 = vxpose.xlu0.b32.start [1/16] %v121, 128
    %484 = vxpose.xlu0.b32.cont [2/16] %v122, 128
    %485 = vxpose.xlu0.b32.cont [3/16] %v123, 128
    %486 = vxpose.xlu0.b32.cont [4/16] %v124, 128
    %487 = vxpose.xlu0.b32.cont [5/16] %v125, 128
    %488 = vxpose.xlu0.b32.cont [6/16] %v126, 128
    %489 = vxpose.xlu0.b32.cont [7/16] %v127, 128
    %490 = vxpose.xlu0.b32.cont [8/16] %v128, 128
    %491 = vxpose.xlu0.b32.cont [9/16] %v129, 128
    %492 = vxpose.xlu0.b32.cont [10/16] %v130, 128
    %493 = vxpose.xlu0.b32.cont [11/16] %v131, 128
    %494 = vxpose.xlu0.b32.cont [12/16] %v132, 128
    %495 = vxpose.xlu0.b32.cont [13/16] %v133, 128
    %496 = vxpose.xlu0.b32.cont [14/16] %v134, 128
    %497 = vxpose.xlu0.b32.cont [15/16] %v135, 128
    %498 = vxpose.xlu0.b32.end [16/16] %v136, 128
    %v499 = vpop.trf.xlu0
    %v500 = vpop.trf.xlu0
    %v501 = vpop.trf.xlu0
    %v502 = vpop.trf.xlu0
    %v503 = vpop.trf.xlu0
    %v504 = vpop.trf.xlu0
    %v505 = vpop.trf.xlu0
    %v506 = vpop.trf.xlu0
    %v507 = vpop.trf.xlu0
    %v508 = vpop.trf.xlu0
    %v509 = vpop.trf.xlu0
    %v510 = vpop.trf.xlu0
    %v511 = vpop.trf.xlu0
    %v512 = vpop.trf.xlu0
    %v513 = vpop.trf.xlu0
    %v514 = vpop.trf.xlu0
    %515 = vxpose.xlu0.b32.start [1/16] %v137, 128
    %516 = vxpose.xlu0.b32.cont [2/16] %v138, 128
    %517 = vxpose.xlu0.b32.cont [3/16] %v139, 128
    %518 = vxpose.xlu0.b32.cont [4/16] %v140, 128
    %519 = vxpose.xlu0.b32.cont [5/16] %v141, 128
    %520 = vxpose.xlu0.b32.cont [6/16] %v142, 128
    %521 = vxpose.xlu0.b32.cont [7/16] %v143, 128
    %522 = vxpose.xlu0.b32.cont [8/16] %v144, 128
    %523 = vxpose.xlu0.b32.cont [9/16] %v145, 128
    %524 = vxpose.xlu0.b32.cont [10/16] %v146, 128
    %525 = vxpose.xlu0.b32.cont [11/16] %v147, 128
    %526 = vxpose.xlu0.b32.cont [12/16] %v148, 128
    %527 = vxpose.xlu0.b32.cont [13/16] %v149, 128
    %528 = vxpose.xlu0.b32.cont [14/16] %v150, 128
    %529 = vxpose.xlu0.b32.cont [15/16] %v151, 128
    %530 = vxpose.xlu0.b32.end [16/16] %v152, 128
    %v531 = vpop.trf.xlu0
    %v532 = vpop.trf.xlu0
    %v533 = vpop.trf.xlu0
    %v534 = vpop.trf.xlu0
    %v535 = vpop.trf.xlu0
    %v536 = vpop.trf.xlu0
    %v537 = vpop.trf.xlu0
    %v538 = vpop.trf.xlu0
    %v539 = vpop.trf.xlu0
    %v540 = vpop.trf.xlu0
    %v541 = vpop.trf.xlu0
    %v542 = vpop.trf.xlu0
    %v543 = vpop.trf.xlu0
    %v544 = vpop.trf.xlu0
    %v545 = vpop.trf.xlu0
    %v546 = vpop.trf.xlu0
    %547 = vxpose.xlu0.b32.start [1/16] %v153, 128
    %548 = vxpose.xlu0.b32.cont [2/16] %v154, 128
    %549 = vxpose.xlu0.b32.cont [3/16] %v155, 128
    %550 = vxpose.xlu0.b32.cont [4/16] %v156, 128
    %551 = vxpose.xlu0.b32.cont [5/16] %v157, 128
    %552 = vxpose.xlu0.b32.cont [6/16] %v158, 128
    %553 = vxpose.xlu0.b32.cont [7/16] %v159, 128
    %554 = vxpose.xlu0.b32.cont [8/16] %v160, 128
    %555 = vxpose.xlu0.b32.cont [9/16] %v161, 128
    %556 = vxpose.xlu0.b32.cont [10/16] %v162, 128
    %557 = vxpose.xlu0.b32.cont [11/16] %v163, 128
    %558 = vxpose.xlu0.b32.cont [12/16] %v164, 128
    %559 = vxpose.xlu0.b32.cont [13/16] %v165, 128
    %560 = vxpose.xlu0.b32.cont [14/16] %v166, 128
    %561 = vxpose.xlu0.b32.cont [15/16] %v167, 128
    %562 = vxpose.xlu0.b32.end [16/16] %v168, 128
    %v563 = vpop.trf.xlu0
    %v564 = vpop.trf.xlu0
    %v565 = vpop.trf.xlu0
    %v566 = vpop.trf.xlu0
    %v567 = vpop.trf.xlu0
    %v568 = vpop.trf.xlu0
    %v569 = vpop.trf.xlu0
    %v570 = vpop.trf.xlu0
    %v571 = vpop.trf.xlu0
    %v572 = vpop.trf.xlu0
    %v573 = vpop.trf.xlu0
    %v574 = vpop.trf.xlu0
    %v575 = vpop.trf.xlu0
    %v576 = vpop.trf.xlu0
    %v577 = vpop.trf.xlu0
    %v578 = vpop.trf.xlu0
    %579 = vxpose.xlu0.b32.start [1/16] %v169, 128
    %580 = vxpose.xlu0.b32.cont [2/16] %v170, 128
    %581 = vxpose.xlu0.b32.cont [3/16] %v171, 128
    %582 = vxpose.xlu0.b32.cont [4/16] %v172, 128
    %583 = vxpose.xlu0.b32.cont [5/16] %v173, 128
    %584 = vxpose.xlu0.b32.cont [6/16] %v174, 128
    %585 = vxpose.xlu0.b32.cont [7/16] %v175, 128
    %586 = vxpose.xlu0.b32.cont [8/16] %v176, 128
    %587 = vxpose.xlu0.b32.cont [9/16] %v177, 128
    %588 = vxpose.xlu0.b32.cont [10/16] %v178, 128
    %589 = vxpose.xlu0.b32.cont [11/16] %v179, 128
    %590 = vxpose.xlu0.b32.cont [12/16] %v180, 128
    %591 = vxpose.xlu0.b32.cont [13/16] %v181, 128
    %592 = vxpose.xlu0.b32.cont [14/16] %v182, 128
    %593 = vxpose.xlu0.b32.cont [15/16] %v183, 128
    %594 = vxpose.xlu0.b32.end [16/16] %v184, 128
    %v595 = vpop.trf.xlu0
    %v596 = vpop.trf.xlu0
    %v597 = vpop.trf.xlu0
    %v598 = vpop.trf.xlu0
    %v599 = vpop.trf.xlu0
    %v600 = vpop.trf.xlu0
    %v601 = vpop.trf.xlu0
    %v602 = vpop.trf.xlu0
    %v603 = vpop.trf.xlu0
    %v604 = vpop.trf.xlu0
    %v605 = vpop.trf.xlu0
    %v606 = vpop.trf.xlu0
    %v607 = vpop.trf.xlu0
    %v608 = vpop.trf.xlu0
    %v609 = vpop.trf.xlu0
    %v610 = vpop.trf.xlu0
    %611 = vxpose.xlu0.b32.start [1/16] %v185, 128
    %612 = vxpose.xlu0.b32.cont [2/16] %v186, 128
    %613 = vxpose.xlu0.b32.cont [3/16] %v187, 128
    %614 = vxpose.xlu0.b32.cont [4/16] %v188, 128
    %615 = vxpose.xlu0.b32.cont [5/16] %v189, 128
    %616 = vxpose.xlu0.b32.cont [6/16] %v190, 128
    %617 = vxpose.xlu0.b32.cont [7/16] %v191, 128
    %618 = vxpose.xlu0.b32.cont [8/16] %v192, 128
    %619 = vxpose.xlu0.b32.cont [9/16] %v193, 128
    %620 = vxpose.xlu0.b32.cont [10/16] %v194, 128
    %621 = vxpose.xlu0.b32.cont [11/16] %v195, 128
    %622 = vxpose.xlu0.b32.cont [12/16] %v196, 128
    %623 = vxpose.xlu0.b32.cont [13/16] %v197, 128
    %624 = vxpose.xlu0.b32.cont [14/16] %v198, 128
    %625 = vxpose.xlu0.b32.cont [15/16] %v199, 128
    %626 = vxpose.xlu0.b32.end [16/16] %v200, 128
    %v627 = vpop.trf.xlu0
    %v628 = vpop.trf.xlu0
    %v629 = vpop.trf.xlu0
    %v630 = vpop.trf.xlu0
    %v631 = vpop.trf.xlu0
    %v632 = vpop.trf.xlu0
    %v633 = vpop.trf.xlu0
    %v634 = vpop.trf.xlu0
    %v635 = vpop.trf.xlu0
    %v636 = vpop.trf.xlu0
    %v637 = vpop.trf.xlu0
    %v638 = vpop.trf.xlu0
    %v639 = vpop.trf.xlu0
    %v640 = vpop.trf.xlu0
    %v641 = vpop.trf.xlu0
    %v642 = vpop.trf.xlu0
    %643 = vxpose.xlu0.b32.start [1/16] %v201, 128
    %644 = vxpose.xlu0.b32.cont [2/16] %v202, 128
    %645 = vxpose.xlu0.b32.cont [3/16] %v203, 128
    %646 = vxpose.xlu0.b32.cont [4/16] %v204, 128
    %647 = vxpose.xlu0.b32.cont [5/16] %v205, 128
    %648 = vxpose.xlu0.b32.cont [6/16] %v206, 128
    %649 = vxpose.xlu0.b32.cont [7/16] %v207, 128
    %650 = vxpose.xlu0.b32.cont [8/16] %v208, 128
    %651 = vxpose.xlu0.b32.cont [9/16] %v209, 128
    %652 = vxpose.xlu0.b32.cont [10/16] %v210, 128
    %653 = vxpose.xlu0.b32.cont [11/16] %v211, 128
    %654 = vxpose.xlu0.b32.cont [12/16] %v212, 128
    %655 = vxpose.xlu0.b32.cont [13/16] %v213, 128
    %656 = vxpose.xlu0.b32.cont [14/16] %v214, 128
    %657 = vxpose.xlu0.b32.cont [15/16] %v215, 128
    %658 = vxpose.xlu0.b32.end [16/16] %v216, 128
    %v659 = vpop.trf.xlu0
    %v660 = vpop.trf.xlu0
    %v661 = vpop.trf.xlu0
    %v662 = vpop.trf.xlu0
    %v663 = vpop.trf.xlu0
    %v664 = vpop.trf.xlu0
    %v665 = vpop.trf.xlu0
    %v666 = vpop.trf.xlu0
    %v667 = vpop.trf.xlu0
    %v668 = vpop.trf.xlu0
    %v669 = vpop.trf.xlu0
    %v670 = vpop.trf.xlu0
    %v671 = vpop.trf.xlu0
    %v672 = vpop.trf.xlu0
    %v673 = vpop.trf.xlu0
    %v674 = vpop.trf.xlu0
    %675 = vxpose.xlu0.b32.start [1/16] %v217, 128
    %676 = vxpose.xlu0.b32.cont [2/16] %v218, 128
    %677 = vxpose.xlu0.b32.cont [3/16] %v219, 128
    %678 = vxpose.xlu0.b32.cont [4/16] %v220, 128
    %679 = vxpose.xlu0.b32.cont [5/16] %v221, 128
    %680 = vxpose.xlu0.b32.cont [6/16] %v222, 128
    %681 = vxpose.xlu0.b32.cont [7/16] %v223, 128
    %682 = vxpose.xlu0.b32.cont [8/16] %v224, 128
    %683 = vxpose.xlu0.b32.cont [9/16] %v225, 128
    %684 = vxpose.xlu0.b32.cont [10/16] %v226, 128
    %685 = vxpose.xlu0.b32.cont [11/16] %v227, 128
    %686 = vxpose.xlu0.b32.cont [12/16] %v228, 128
    %687 = vxpose.xlu0.b32.cont [13/16] %v229, 128
    %688 = vxpose.xlu0.b32.cont [14/16] %v230, 128
    %689 = vxpose.xlu0.b32.cont [15/16] %v231, 128
    %690 = vxpose.xlu0.b32.end [16/16] %v232, 128
    %v691 = vpop.trf.xlu0
    %v692 = vpop.trf.xlu0
    %v693 = vpop.trf.xlu0
    %v694 = vpop.trf.xlu0
    %v695 = vpop.trf.xlu0
    %v696 = vpop.trf.xlu0
    %v697 = vpop.trf.xlu0
    %v698 = vpop.trf.xlu0
    %v699 = vpop.trf.xlu0
    %v700 = vpop.trf.xlu0
    %v701 = vpop.trf.xlu0
    %v702 = vpop.trf.xlu0
    %v703 = vpop.trf.xlu0
    %v704 = vpop.trf.xlu0
    %v705 = vpop.trf.xlu0
    %v706 = vpop.trf.xlu0
    %707 = vxpose.xlu0.b32.start [1/16] %v233, 128
    %708 = vxpose.xlu0.b32.cont [2/16] %v234, 128
    %709 = vxpose.xlu0.b32.cont [3/16] %v235, 128
    %710 = vxpose.xlu0.b32.cont [4/16] %v236, 128
    %711 = vxpose.xlu0.b32.cont [5/16] %v237, 128
    %712 = vxpose.xlu0.b32.cont [6/16] %v238, 128
    %713 = vxpose.xlu0.b32.cont [7/16] %v239, 128
    %714 = vxpose.xlu0.b32.cont [8/16] %v240, 128
    %715 = vxpose.xlu0.b32.cont [9/16] %v241, 128
    %716 = vxpose.xlu0.b32.cont [10/16] %v242, 128
    %717 = vxpose.xlu0.b32.cont [11/16] %v243, 128
    %718 = vxpose.xlu0.b32.cont [12/16] %v244, 128
    %719 = vxpose.xlu0.b32.cont [13/16] %v245, 128
    %720 = vxpose.xlu0.b32.cont [14/16] %v246, 128
    %721 = vxpose.xlu0.b32.cont [15/16] %v247, 128
    %722 = vxpose.xlu0.b32.end [16/16] %v248, 128
    %v723 = vpop.trf.xlu0
    %v724 = vpop.trf.xlu0
    %v725 = vpop.trf.xlu0
    %v726 = vpop.trf.xlu0
    %v727 = vpop.trf.xlu0
    %v728 = vpop.trf.xlu0
    %v729 = vpop.trf.xlu0
    %v730 = vpop.trf.xlu0
    %v731 = vpop.trf.xlu0
    %v732 = vpop.trf.xlu0
    %v733 = vpop.trf.xlu0
    %v734 = vpop.trf.xlu0
    %v735 = vpop.trf.xlu0
    %v736 = vpop.trf.xlu0
    %v737 = vpop.trf.xlu0
    %v738 = vpop.trf.xlu0
    %739 = vxpose.xlu0.b32.start [1/16] %v249, 128
    %740 = vxpose.xlu0.b32.cont [2/16] %v250, 128
    %741 = vxpose.xlu0.b32.cont [3/16] %v251, 128
    %742 = vxpose.xlu0.b32.cont [4/16] %v252, 128
    %743 = vxpose.xlu0.b32.cont [5/16] %v253, 128
    %744 = vxpose.xlu0.b32.cont [6/16] %v254, 128
    %745 = vxpose.xlu0.b32.cont [7/16] %v255, 128
    %746 = vxpose.xlu0.b32.cont [8/16] %v256, 128
    %747 = vxpose.xlu0.b32.cont [9/16] %v257, 128
    %748 = vxpose.xlu0.b32.cont [10/16] %v258, 128
    %749 = vxpose.xlu0.b32.cont [11/16] 0.0, 128
    %750 = vxpose.xlu0.b32.cont [12/16] 0.0, 128
    %751 = vxpose.xlu0.b32.cont [13/16] 0.0, 128
    %752 = vxpose.xlu0.b32.cont [14/16] 0.0, 128
    %753 = vxpose.xlu0.b32.cont [15/16] 0.0, 128
    %754 = vxpose.xlu0.b32.end [16/16] 0.0, 128
    %v755 = vpop.trf.xlu0
    %v756 = vpop.trf.xlu0
    %v757 = vpop.trf.xlu0
    %v758 = vpop.trf.xlu0
    %v759 = vpop.trf.xlu0
    %v760 = vpop.trf.xlu0
    %v761 = vpop.trf.xlu0
    %v762 = vpop.trf.xlu0
    %v763 = vpop.trf.xlu0
    %v764 = vpop.trf.xlu0
    %v765 = vpop.trf.xlu0
    %v766 = vpop.trf.xlu0
    %v767 = vpop.trf.xlu0
    %v768 = vpop.trf.xlu0
    %v769 = vpop.trf.xlu0
    %v770 = vpop.trf.xlu0
    %771 = vst [vmem:[#allocation2] sm:$0xff] %v275
    %772 = vst [vmem:[#allocation2 + $0x8] sm:$0xff] %v307
    %773 = vst [vmem:[#allocation2 + $0x10] sm:$0xff] %v339
    %774 = vst [vmem:[#allocation2 + $0x18] sm:$0xff] %v371
    %775 = vst [vmem:[#allocation2 + $0x20] sm:$0xff] %v403
    %776 = vst [vmem:[#allocation2 + $0x28] sm:$0xff] %v435
    %777 = vst [vmem:[#allocation2 + $0x30] sm:$0xff] %v467
    %778 = vst [vmem:[#allocation2 + $0x38] sm:$0xff] %v499
    %779 = vst [vmem:[#allocation2 + $0x40] sm:$0xff] %v531
    %780 = vst [vmem:[#allocation2 + $0x48] sm:$0xff] %v563
    %781 = vst [vmem:[#allocation2 + $0x50] sm:$0xff] %v595
    %782 = vst [vmem:[#allocation2 + $0x58] sm:$0xff] %v627
    %783 = vst [vmem:[#allocation2 + $0x60] sm:$0xff] %v659
    %784 = vst [vmem:[#allocation2 + $0x68] sm:$0xff] %v691
    %785 = vst [vmem:[#allocation2 + $0x70] sm:$0xff] %v723
    %vm786 = vcmask 654336
    %787 = vst.msk [vmem:[#allocation2 + $0x78] sm:$0xff] %vm786, %v755
    // Predicated region
    $region6: #{tpu_custom_call.1} parent=1 // pred_check
      _
    $region7: #{tpu_custom_call.1} parent=1 // pred_check_branch
      %789 = sbr.rel (0) target = $region9
    $region8: #{tpu_custom_call.1} parent=1 // pred_region
      %s791 = ssub.s32 2048, 2048
      %792 = vsyncadd [#allocation3], %s791
      %s794 = sshll.u32 [#allocation2], 4
      %s795 = int_to_ptr.vmem [resolvable:$true] %s794
      %797 = dma.vmem_to_hbm [thread:$0]  %s795, 2048, %s1, [#allocation3]
    $region9: #{tpu_custom_call.1} parent=1 // pred_fallthru
      _
    // Predicated region
    $region10: #{tpu_custom_call.1} parent=1 // pred_check
      _
    $region11: #{tpu_custom_call.1} parent=1 // pred_check_branch
      %799 = sbr.rel (0) target = $region13
    $region12: #{tpu_custom_call.1} parent=1 // pred_region
      %800 = dma.done [#allocation3], 2048
    $region13: #{tpu_custom_call.1} parent=1 // pred_fallthru
      _
    %801 = vsyncpa [#allocation3], 1

</llo_original>
